<compile_context>
chip_gen: v7x
topology: tpu7x:2x2x1
jax: 0.10.0
libtpu: 0.0.40
codegen_flags: <defaults>
</compile_context>

<pallas_src>
import jax
import jax.numpy as jnp
from jax import lax
from jax.experimental import pallas as pl
from jax.experimental.pallas import tpu as pltpu


def _round_up(x, m):
    return ((x + m - 1) // m) * m


def _similarity_kernel(h_ref, p_ref, o_ref):
    # h_ref : (1, Q, C)  bf16   MLP-embedded query features (this batch elem)
    # p_ref : (1, TN, C) f32    point-cloud tile
    # o_ref : (1, Q, TN) f32    similarity logits tile
    h = h_ref[0]                                   # (Q, C)  bf16
    p = p_ref[0].astype(jnp.bfloat16)              # (TN, C) bf16 (in-register)
    # einsum('qc,nc->qn'): contract the shared C axis directly (NT form, no
    # transpose / XLU relayout); f32 accumulation on the MXU.
    sim = lax.dot_general(h, p,
                          dimension_numbers=(((1,), (1,)), ((), ())),
                          preferred_element_type=jnp.float32)
    o_ref[0] = sim.astype(o_ref.dtype)


def mask_prediction_head(query_feats, ptc_feats, params, *,
                         tn_target=2048,
                         out_dtype=jnp.float32,
                         vmem_budget_bytes=40 << 20):
    """query_feats: (B, Q, C), ptc_feats: (B, N, C) -> (B, Q, N)."""
    B, Q, C = query_feats.shape
    Bp, N, Cp = ptc_feats.shape
    assert Bp == B and Cp == C
    w1, b1, w2, b2, w3, b3 = params

    # --- mask_embed MLP hoisted out of the kernel (computed once in XLA,
    #     f32; 6*Q*C^2 flops << 2*Q*N*C similarity flops) -------------------
    h = query_feats.astype(jnp.float32)
    h = jnp.maximum(h @ w1 + b1, 0.0)
    h = jnp.maximum(h @ w2 + b2, 0.0)
    h = h @ w3 + b3
    h_bf16 = h.astype(jnp.bfloat16)                # (B, Q, C), tiny tensor

    # --- lane-dense N tiling ------------------------------------------------
    out_bytes = jnp.dtype(out_dtype).itemsize
    p_bytes = jnp.dtype(ptc_feats.dtype).itemsize
    tn = min(_round_up(tn_target, 128), _round_up(N, 128))

    # Double-buffered per-step working set (h tile + ptc tile + out tile).
    def step_bytes(t):
        return 2 * (Q * C * 2 + t * C * p_bytes + Q * t * out_bytes)

    while tn > 128 and step_bytes(tn) > vmem_budget_bytes:
        tn -= 128

    # Keep at least 2 total grid steps when possible so v7x's two TensorCores
    # both get work (no measured effect on single-TC v5e/v6e).
    if B * pl.cdiv(N, tn) < 2 and N > 128:
        tn = _round_up(pl.cdiv(N, 2), 128)

    n_tiles = pl.cdiv(N, tn)
    vmem_limit = int(min(step_bytes(tn) + (4 << 20), 48 << 20))

    flops = 2 * B * Q * N * C
    bytes_accessed = (h_bf16.size * 2 + ptc_feats.size * p_bytes
                      + B * Q * N * out_bytes)

    return pl.pallas_call(
        _similarity_kernel,
        out_shape=jax.ShapeDtypeStruct((B, Q, N), out_dtype),
        grid_spec=pltpu.PrefetchScalarGridSpec(
            num_scalar_prefetch=0,
            grid=(B, n_tiles),
            in_specs=[
                pl.BlockSpec((1, Q, C), lambda b, n: (b, 0, 0)),    # h (bf16)
                pl.BlockSpec((1, tn, C), lambda b, n: (b, n, 0)),   # ptc tile
            ],
            out_specs=pl.BlockSpec((1, Q, tn), lambda b, n: (b, 0, n)),
        ),
        compiler_params=pltpu.CompilerParams(
            dimension_semantics=("parallel", "parallel"),
            vmem_limit_bytes=vmem_limit),
        cost_estimate=pl.CostEstimate(
            flops=flops, transcendentals=0, bytes_accessed=bytes_accessed),
    )(h_bf16, ptc_feats)


def init_params(key, d_model):
    """Deterministic synthetic parameters for the 3-layer mask_embed MLP.

    Weights are stored as (in, out) so x @ W + b matches torch's
    x @ W_t.T + b with W = W_t.T."""
    ks = jax.random.split(key, 6)
    scale = 1.0 / jnp.sqrt(d_model)
    mk = lambda k, shp: jax.random.uniform(k, shp, jnp.float32, -scale, scale)
    return (mk(ks[0], (d_model, d_model)), mk(ks[1], (d_model,)),
            mk(ks[2], (d_model, d_model)), mk(ks[3], (d_model,)),
            mk(ks[4], (d_model, d_model)), mk(ks[5], (d_model,)))


def reference(query_feats, ptc_feats, params, matmul_dtype=jnp.float32):
    """Pure-JAX reference.  With matmul_dtype=bf16 it mirrors the kernel's
    precision policy for the similarity step (bf16 operands, f32 accum)."""
    w1, b1, w2, b2, w3, b3 = params
    h = query_feats.astype(jnp.float32)
    h = jnp.maximum(h @ w1 + b1, 0.0)
    h = jnp.maximum(h @ w2 + b2, 0.0)
    h = h @ w3 + b3
    return jnp.einsum('bqc,bnc->bqn',
                      h.astype(matmul_dtype), ptc_feats.astype(matmul_dtype),
                      preferred_element_type=jnp.float32)


if __name__ == "__main__":
    key = jax.random.PRNGKey(0)

    # Case 1: small shapes consistent with the module.
    B, Q, N, C = 2, 8, 16, 32     # batch, num queries, num points, d_model
    k1, k2, k3, k4, k5 = jax.random.split(key, 5)
    query_feats = jax.random.normal(k1, (B, Q, C), jnp.float32)
    ptc_feats = jax.random.normal(k2, (B, N, C), jnp.float32)
    params = init_params(k3, C)

    out = jax.block_until_ready(mask_prediction_head(query_feats, ptc_feats, params))
    assert out.shape == (B, Q, N) and out.dtype == jnp.float32
    ref = reference(query_feats, ptc_feats, params, matmul_dtype=jnp.bfloat16)
    assert jnp.allclose(out, ref, atol=5e-3, rtol=1e-3), \
        f"max abs err {jnp.max(jnp.abs(out - ref))}"

    # Case 2: ragged / multi-tile N (exercises block clipping, B*n_tiles >= 2).
    B2, Q2, N2, C2 = 1, 8, 272, 32
    qf2 = jax.random.normal(k4, (B2, Q2, C2), jnp.float32)
    pf2 = jax.random.normal(k5, (B2, N2, C2), jnp.float32)
    params2 = init_params(k3, C2)
    out2 = jax.block_until_ready(mask_prediction_head(qf2, pf2, params2))
    assert out2.shape == (B2, Q2, N2)
    ref2 = reference(qf2, pf2, params2, matmul_dtype=jnp.bfloat16)
    assert jnp.allclose(out2, ref2, atol=5e-3, rtol=1e-3), \
        f"max abs err {jnp.max(jnp.abs(out2 - ref2))}"

    print("KERNEL_OK")
</pallas_src>

<mosaic_0001>
module attributes {stable_mosaic.version = 11 : i64} {
  func.func @_similarity_kernel(%arg0: i32, %arg1: i32, %arg2: memref<1x8x32xbf16, #tpu.memory_space<vmem>>, %arg3: memref<1x128x32xf32, #tpu.memory_space<vmem>>, %arg4: memref<1x8x128xf32, #tpu.memory_space<vmem>>) attributes {dimension_semantics = [#tpu.dimension_semantics<parallel>, #tpu.dimension_semantics<parallel>], iteration_bounds = array<i64: 2, 1>, scalar_prefetch = 0 : i64, scratch_operands = 0 : i64, tpu.core_type = #tpu.core_type<tc>, window_params = [{transform_indices = @transform_0, window_bounds = array<i64: 1, 8, 32>}, {transform_indices = @transform_1, window_bounds = array<i64: 1, 128, 32>}, {transform_indices = @transform_2, window_bounds = array<i64: 1, 8, 128>}]} {
    %c0 = arith.constant 0 : index
    %c0_0 = arith.constant 0 : index
    %c0_1 = arith.constant 0 : index
    %0 = vector.load %arg2[%c0, %c0_0, %c0_1] : memref<1x8x32xbf16, #tpu.memory_space<vmem>>, vector<1x8x32xbf16>
    %1 = vector.shape_cast %0 : vector<1x8x32xbf16> to vector<8x32xbf16>
    %c0_2 = arith.constant 0 : index
    %c0_3 = arith.constant 0 : index
    %c0_4 = arith.constant 0 : index
    %2 = vector.load %arg3[%c0_2, %c0_3, %c0_4] : memref<1x128x32xf32, #tpu.memory_space<vmem>>, vector<1x128x32xf32>
    %3 = vector.shape_cast %2 : vector<1x128x32xf32> to vector<128x32xf32>
    %4 = arith.truncf %3 : vector<128x32xf32> to vector<128x32xbf16>
    %cst = arith.constant dense<0.000000e+00> : vector<8x128xf32>
    %5 = tpu.matmul %1, %4, %cst {dimension_numbers = #tpu.dot_dimension_numbers<[1], [1], [0], [0], [0, 0, 1, 0], [], []>} : vector<8x32xbf16>, vector<128x32xbf16>, vector<8x128xf32> -> vector<8x128xf32>
    %c0_5 = arith.constant 0 : index
    %c0_6 = arith.constant 0 : index
    %c0_7 = arith.constant 0 : index
    %6 = vector.load %arg4[%c0_5, %c0_6, %c0_7] : memref<1x8x128xf32, #tpu.memory_space<vmem>>, vector<1x8x128xf32>
    %7 = vector.shape_cast %6 : vector<1x8x128xf32> to vector<8x128xf32>
    %8 = vector.shape_cast %5 : vector<8x128xf32> to vector<1x8x128xf32>
    tpu.vector_store %arg4[%c0_5, %c0_6, %c0_7], %8 {strides = array<i32>} : memref<1x8x128xf32, #tpu.memory_space<vmem>>, vector<1x8x128xf32>,
    return
  }
  func.func @transform_0(%arg0: i32, %arg1: i32) -> (i32, i32, i32) {
    %c0_i32 = arith.constant 0 : i32
    %c0_i32_0 = arith.constant 0 : i32
    %c0_i32_1 = arith.constant 0 : i32
    return %arg0, %c0_i32, %c0_i32_0 : i32, i32, i32
  }
  func.func @transform_1(%arg0: i32, %arg1: i32) -> (i32, i32, i32) {
    %c0_i32 = arith.constant 0 : i32
    %c0_i32_0 = arith.constant 0 : i32
    return %arg0, %arg1, %c0_i32 : i32, i32, i32
  }
  func.func @transform_2(%arg0: i32, %arg1: i32) -> (i32, i32, i32) {
    %c0_i32 = arith.constant 0 : i32
    %c0_i32_0 = arith.constant 0 : i32
    return %arg0, %c0_i32, %arg1 : i32, i32, i32
  }
}

</mosaic_0001>

<llo_original>
// kernel: tpu_custom_call.1
$region0: #{tpu_custom_call.1}
  #allocation0 [shape = 'u32[]', space=smem, size = 0x4, offset = 0x4, fixed_abs, tag = 'smem constant byte address 0x4 - core index']
  #allocation1 [shape = 'u32[144,128]{1,0:T(1,128)}', space=vmem, size = 0x12000, scoped, tag = 'internal scratch']
  %s0 = inlined_call_operand.hbm [shape: bf16[2,8,32], index: 0, kind: input, shape index: {}]
  %s1 = inlined_call_operand.hbm [shape: f32[2,16,32], index: 1, kind: input, shape index: {}]
  %s2 = inlined_call_operand.hbm [shape: f32[2,8,16], index: 2, kind: output, shape index: {}]
  %s3 = sld [smem:[#allocation0]]
  $region49: #{tpu_custom_call.1} parent=0
    _
  %s5 = ssub.s32 1, %s3
  %s6 = scalar_select 0, %s5, %s3
  $region1: #{tpu_custom_call.1} parent=0
    #allocation2 [shape = 'u8[4096]{0}', space=vmem, size = 0x1000, scoped, tag = 'input window, operand 0']
    #allocation3 [shape = 's32[2]{0}', space=sflag, size = 0x8, scoped, tag = 'scoped memory for tpu_custom_call.1']
    #allocation4 [shape = 's32[2]{0}', space=sflag, size = 0x8, scoped, tag = 'scoped memory for tpu_custom_call.1']
    #allocation5 [shape = 'u8[131072]{0}', space=vmem, size = 0x20000, scoped, tag = 'input window, operand 1']
    #allocation6 [shape = 's32[2]{0}', space=sflag, size = 0x8, scoped, tag = 'scoped memory for tpu_custom_call.1']
    #allocation7 [shape = 'u8[8192]{0}', space=vmem, size = 0x2000, scoped, tag = 'output window, operand 0']
    %7 = vsyncpa [#allocation3], 0
    %s8 = scalar_lea.sflag [#allocation3], 1
    %9 = vsyncpa %s8, 0
    %10 = vsyncpa [#allocation6], 0
    %s11 = scalar_lea.sflag [#allocation6], 1
    %12 = vsyncpa %s11, 0
    %13 = vsyncpa [#allocation4], 0
    %s14 = scalar_lea.sflag [#allocation4], 1
    %15 = vsyncpa %s14, 0
    loop: start=0, step=1, limit=4
    $region2: #{tpu_custom_call.1} parent=1 // loop_pre_header
      _
    $region3: #{tpu_custom_call.1} parent=1 // loop_header
      %s17 = sphi 0, %s21
      %p18 = scmp.ge.s32.totalorder %s17, 4
      %s24 = sphi 0, %s36
      %s25 = sphi 0, %s32
      %s26 = sphi 0, %s24
      %s27 = sphi 0, %s25
      %s28 = sphi 0, %s26
      %s29 = sphi 0, %s27
      %s39 = sphi 0, %s41
      %s42 = sphi 0, %s39
      %s43 = sphi 0, %s42
      %s59 = sphi 0, %s43
      %s67 = sphi 0, %s69
      %s70 = sphi 0, %s67
      %s71 = sphi 0, %s70
      %s87 = sphi 0, %s71
      %s95 = sphi 0, %s97
      %s98 = sphi 0, %s95
      %s99 = sphi 0, %s98
      %s115 = sphi 0, %s99
    $region4: #{tpu_custom_call.1} parent=1 // loop_header_branch
      %20 = sbr.rel (%p18) target = $region8
    $region5: #{tpu_custom_call.1} parent=1 // loop_body
      %s22 = ssub.s32 %s17, 1
      %s23 = ssub.s32 %s17, 2
      %s30 = sadd.s32 1, %s25
      %p31 = scmp.ge.s32.totalorder %s30, 1
      %s32 = scalar_select %p31, 0, %s30
      %s33 = sadd.s32 1, %s24
      %s34 = scalar_select %p31, %s33, %s24
      %p35 = scmp.ge.s32.totalorder %s34, 2
      %s36 = scalar_select %p35, 0, %s34
      %s37 = ssub.s32 %s24, %s36
      %p38 = scmp.eq.s32.totalorder %s37, 0
      %s40 = sadd.s32 %s39, 1
      %s41 = scalar_select %p38, %s39, %s40
      %p44 = pneg %p38
      %p45 = scmp.eq.s32.totalorder %s17, 1
      %p46 = por %p44, %p45
      %p47 = scmp.ne.s32.totalorder %s39, %s42
      %p48 = scmp.eq.s32.totalorder %s17, 0
      %p49 = por %p47, %p48
      %p50 = scmp.ne.s32.totalorder %s39, %s42
      %p51 = scmp.eq.s32.totalorder %s22, 1
      %p52 = por %p50, %p51
      %p53 = scmp.ne.s32.totalorder %s42, %s43
      %p54 = scmp.eq.s32.totalorder %s22, 0
      %p55 = por %p53, %p54
      %p56 = scmp.ne.s32.totalorder %s42, %s43
      %p57 = scmp.eq.s32.totalorder %s23, 1
      %p58 = por %p56, %p57
      %p60 = scmp.ne.s32.totalorder %s43, %s59
      %p61 = scmp.eq.s32.totalorder %s23, 0
      %p62 = por %p60, %p61
      %s63 = ssub.s32 %s24, %s36
      %s64 = ssub.s32 %s25, %s32
      %s65 = sor.u32 %s63, %s64
      %p66 = scmp.eq.s32.totalorder %s65, 0
      %s68 = sadd.s32 %s67, 1
      %s69 = scalar_select %p66, %s67, %s68
      %p72 = pneg %p66
      %p73 = scmp.eq.s32.totalorder %s17, 1
      %p74 = por %p72, %p73
      %p75 = scmp.ne.s32.totalorder %s67, %s70
      %p76 = scmp.eq.s32.totalorder %s17, 0
      %p77 = por %p75, %p76
      %p78 = scmp.ne.s32.totalorder %s67, %s70
      %p79 = scmp.eq.s32.totalorder %s22, 1
      %p80 = por %p78, %p79
      %p81 = scmp.ne.s32.totalorder %s70, %s71
      %p82 = scmp.eq.s32.totalorder %s22, 0
      %p83 = por %p81, %p82
      %p84 = scmp.ne.s32.totalorder %s70, %s71
      %p85 = scmp.eq.s32.totalorder %s23, 1
      %p86 = por %p84, %p85
      %p88 = scmp.ne.s32.totalorder %s71, %s87
      %p89 = scmp.eq.s32.totalorder %s23, 0
      %p90 = por %p88, %p89
      %s91 = ssub.s32 %s24, %s36
      %s92 = ssub.s32 %s25, %s32
      %s93 = sor.u32 %s91, %s92
      %p94 = scmp.eq.s32.totalorder %s93, 0
      %s96 = sadd.s32 %s95, 1
      %s97 = scalar_select %p94, %s95, %s96
      %p100 = pneg %p94
      %p101 = scmp.eq.s32.totalorder %s17, 1
      %p102 = por %p100, %p101
      %p103 = scmp.ne.s32.totalorder %s95, %s98
      %p104 = scmp.eq.s32.totalorder %s17, 0
      %p105 = por %p103, %p104
      %p106 = scmp.ne.s32.totalorder %s95, %s98
      %p107 = scmp.eq.s32.totalorder %s22, 1
      %p108 = por %p106, %p107
      %p109 = scmp.ne.s32.totalorder %s98, %s99
      %p110 = scmp.eq.s32.totalorder %s22, 0
      %p111 = por %p109, %p110
      %p112 = scmp.ne.s32.totalorder %s98, %s99
      %p113 = scmp.eq.s32.totalorder %s23, 1
      %p114 = por %p112, %p113
      %p116 = scmp.ne.s32.totalorder %s99, %s115
      %p117 = scmp.eq.s32.totalorder %s23, 0
      %p118 = por %p116, %p117
      %p119 = scmp.le.s32.totalorder 1, %s17
      %p120 = scmp.lt.s32.totalorder %s17, 3
      %p121 = pnand %p119, %p120
      %p122 = pneg %p121
      // Predicated region
      $region9: #{tpu_custom_call.1} parent=5 // pred_check
        _
      $region10: #{tpu_custom_call.1} parent=5 // pred_check_branch
        %124 = sbr.rel (%p121) target = $region12
      $region11: #{tpu_custom_call.1} parent=5 // pred_region
        %s125 = ssub.s32 %s17, 1
      $region12: #{tpu_custom_call.1} parent=5 // pred_fallthru
        _
      %p126 = scmp.lt.s32.totalorder %s17, 2
      // Predicated region
      $region13: #{tpu_custom_call.1} parent=5 // pred_check
        %p127 = pneg %p126
      $region14: #{tpu_custom_call.1} parent=5 // pred_check_branch
        %129 = sbr.rel (%p127) target = $region16
      $region15: #{tpu_custom_call.1} parent=5 // pred_region
        // Predicated region
        $region17: #{tpu_custom_call.1} parent=15 // pred_check
          %p130 = pneg %p49
        $region18: #{tpu_custom_call.1} parent=15 // pred_check_branch
          %132 = sbr.rel (%p130) target = $region20
        $region19: #{tpu_custom_call.1} parent=15 // pred_region
          %s133 = sand.u32 %s39, 1
          %s134 = scalar_lea.sflag [#allocation3], %s133
          %s135 = sand.u32 %s39, 1
          %s136 = smul.addr %s135, 4
          %s137 = scalar_lea.vmem [#allocation2], %s136
          %s139 = ssub.s32 64, 64
          %140 = vsyncadd %s134, %s139
          %s141 = smul.addr %s24, 64
          %s142 = scalar_lea.hbm %s0, %s141
          %s144 = sshll.u32 %s137, 4
          %s145 = int_to_ptr.vmem [resolvable:$true] %s144
          %147 = dma.hbm_to_vmem [thread:$0]  %s142, 64, %s145, %s134
        $region20: #{tpu_custom_call.1} parent=15 // pred_fallthru
          _
        // Predicated region
        $region21: #{tpu_custom_call.1} parent=15 // pred_check
          %p148 = pneg %p77
        $region22: #{tpu_custom_call.1} parent=15 // pred_check_branch
          %150 = sbr.rel (%p148) target = $region24
        $region23: #{tpu_custom_call.1} parent=15 // pred_region
          %s151 = sand.u32 %s67, 1
          %s152 = scalar_lea.sflag [#allocation6], %s151
          %s153 = sand.u32 %s67, 1
          %s154 = smul.addr %s153, 128
          %s155 = scalar_lea.vmem [#allocation5], %s154
          %s156 = smul.u32 16, %s25
          %s157 = ssub.s32 2, %s156
          %s158 = smul.u32 128, %s157
          %s160 = ssub.s32 2048, %s158
          %161 = vsyncadd %s152, %s160
          %p162 = scmp.ne.s32.totalorder 0, %s158
          %s163 = smul.addr %s24, 2
          %s164 = sadd.s32 %s156, %s163
          %s165 = smul.addr %s164, 128
          %s166 = scalar_lea.hbm %s1, %s165
          %s167 = smul.u32 8, %s157
          %s168 = sshll.u32 %s155, 4
          %s169 = int_to_ptr.vmem [resolvable:$true] %s168
          %s170 = sshll.u32 %s167, 4
          %174 = dma.hbm_to_vmem [thread:$0]  (%p162), %s166, %s170, %s169, %s152, 128, 128, 8
        $region24: #{tpu_custom_call.1} parent=15 // pred_fallthru
          _
      $region16: #{tpu_custom_call.1} parent=5 // pred_fallthru
        _
      %p175 = scmp.le.s32.totalorder 1, %s17
      %p176 = scmp.lt.s32.totalorder %s17, 3
      %p177 = pnand %p175, %p176
      %p178 = pneg %p177
      // Predicated region
      $region25: #{tpu_custom_call.1} parent=5 // pred_check
        _
      $region26: #{tpu_custom_call.1} parent=5 // pred_check_branch
        %180 = sbr.rel (%p177) target = $region28
      $region27: #{tpu_custom_call.1} parent=5 // pred_region
        %s181 = ssub.s32 %s17, 1
        %s182 = sand.u32 %s42, 1
        %s183 = scalar_lea.sflag [#allocation3], %s182
        %s184 = sand.u32 %s42, 1
        %s185 = smul.addr %s184, 4
        %s186 = scalar_lea.vmem [#allocation2], %s185
        // Predicated region
        $region29: #{tpu_custom_call.1} parent=27 // pred_check
          %p187 = pneg %p55
        $region30: #{tpu_custom_call.1} parent=27 // pred_check_branch
          %189 = sbr.rel (%p187) target = $region32
        $region31: #{tpu_custom_call.1} parent=27 // pred_region
          %190 = dma.done %s183, 64
        $region32: #{tpu_custom_call.1} parent=27 // pred_fallthru
          _
        %s191 = sand.u32 %s70, 1
        %s192 = scalar_lea.sflag [#allocation6], %s191
        %s193 = sand.u32 %s70, 1
        %s194 = smul.addr %s193, 128
        %s195 = scalar_lea.vmem [#allocation5], %s194
        // Predicated region
        $region33: #{tpu_custom_call.1} parent=27 // pred_check
          %p196 = pneg %p83
        $region34: #{tpu_custom_call.1} parent=27 // pred_check_branch
          %198 = sbr.rel (%p196) target = $region36
        $region35: #{tpu_custom_call.1} parent=27 // pred_region
          %199 = dma.done %s192, 2048
        $region36: #{tpu_custom_call.1} parent=27 // pred_fallthru
          _
        %s200 = sand.u32 %s42, 1
        %s201 = scalar_lea.sflag [#allocation3], %s200
        %s202 = sand.u32 %s42, 1
        %s203 = smul.addr %s202, 4
        %s204 = scalar_lea.vmem [#allocation2], %s203
        %p205 = pneg %p55
        %p206 = pneg %p52
        %s207 = sand.u32 %s70, 1
        %s208 = scalar_lea.sflag [#allocation6], %s207
        %s209 = sand.u32 %s70, 1
        %s210 = smul.addr %s209, 128
        %s211 = scalar_lea.vmem [#allocation5], %s210
        %p212 = pneg %p83
        %p213 = pneg %p80
        %p214 = pneg %p111
        %p215 = pneg %p108
        %s216 = sand.u32 %s98, 1
        %s217 = scalar_lea.sflag [#allocation4], %s216
        %s218 = sand.u32 %s98, 1
        %s219 = smul.addr %s218, 8
        %s220 = scalar_lea.vmem [#allocation7], %s219
        %s221 = smul.u32 16, %s27
        %s222 = ssub.s32 2, %s221
        %s223 = smul.u32 128, %s222
        %v225 = vld [vmem:[%s186] sm:$0xf]
        %v226 = vld [vmem:[%s195] sm:$0xff]
        %v227 = vld [vmem:[%s195 + $0x8] sm:$0xff]
        %v228 = vld [vmem:[%s195 + $0x10] sm:$0xff]
        %v229 = vld [vmem:[%s195 + $0x18] sm:$0xff]
        %v230 = vld [vmem:[%s195 + $0x20] sm:$0xff]
        %v231 = vld [vmem:[%s195 + $0x28] sm:$0xff]
        %v232 = vld [vmem:[%s195 + $0x30] sm:$0xff]
        %v233 = vld [vmem:[%s195 + $0x38] sm:$0xff]
        %v234 = vld [vmem:[%s195 + $0x40] sm:$0xff]
        %v235 = vld [vmem:[%s195 + $0x48] sm:$0xff]
        %v236 = vld [vmem:[%s195 + $0x50] sm:$0xff]
        %v237 = vld [vmem:[%s195 + $0x58] sm:$0xff]
        %v238 = vld [vmem:[%s195 + $0x60] sm:$0xff]
        %v239 = vld [vmem:[%s195 + $0x68] sm:$0xff]
        %v240 = vld [vmem:[%s195 + $0x70] sm:$0xff]
        %v241 = vld [vmem:[%s195 + $0x78] sm:$0xff]
        %v242 = vpack.c.bf16 %v227, %v226
        %v243 = vpack.c.bf16 %v229, %v228
        %v244 = vpack.c.bf16 %v231, %v230
        %v245 = vpack.c.bf16 %v233, %v232
        %v246 = vpack.c.bf16 %v235, %v234
        %v247 = vpack.c.bf16 %v237, %v236
        %v248 = vpack.c.bf16 %v239, %v238
        %v249 = vpack.c.bf16 %v241, %v240
        %vm250 = vcmask 261120
        %v252 = vsel %vm250, %v225, 0
        %v255 = vsel %vm250, %v242, 0
        %v258 = vsel %vm250, %v243, 0
        %v261 = vsel %vm250, %v244, 0
        %v264 = vsel %vm250, %v245, 0
        %v267 = vsel %vm250, %v246, 0
        %v270 = vsel %vm250, %v247, 0
        %v273 = vsel %vm250, %v248, 0
        %v276 = vsel %vm250, %v249, 0
        %278 = vmatprep.subr.bf16.mxu0 0
        %279 = vmatpush1.bf16.xpose.msra.mxu0 %v255
        %280 = vmatprep.subr.bf16.mxu0 0
        %281 = vmatpush1.bf16.xpose.msra.mxu0 %v258
        %282 = vmatprep.subr.bf16.mxu0 0
        %283 = vmatpush1.bf16.xpose.msra.mxu0 %v261
        %284 = vmatprep.subr.bf16.mxu0 0
        %285 = vmatpush1.bf16.xpose.msra.mxu0 %v264
        %286 = vmatprep.subr.bf16.mxu0 0
        %287 = vmatpush1.bf16.xpose.msra.mxu0 %v267
        %288 = vmatprep.subr.bf16.mxu0 0
        %289 = vmatpush1.bf16.xpose.msra.mxu0 %v270
        %290 = vmatprep.subr.bf16.mxu0 0
        %291 = vmatpush1.bf16.xpose.msra.mxu0 %v273
        %292 = vmatprep.subr.bf16.mxu0 0
        %293 = vmatpush1.bf16.xpose.msra.mxu0 %v276
        %294 = vmatprep.subr.bf16.mxu0 0
        %295 = vmatpush1.bf16.xpose.msra.mxu0 0
        %296 = vmatprep.subr.bf16.mxu0 0
        %297 = vmatpush1.bf16.xpose.msra.mxu0 0
        %298 = vmatprep.subr.bf16.mxu0 0
        %299 = vmatpush1.bf16.xpose.msra.mxu0 0
        %300 = vmatprep.subr.bf16.mxu0 0
        %301 = vmatpush1.bf16.xpose.msra.mxu0 0
        %302 = vmatprep.subr.bf16.mxu0 0
        %303 = vmatpush1.bf16.xpose.msra.mxu0 0
        %304 = vmatprep.subr.bf16.mxu0 0
        %305 = vmatpush1.bf16.xpose.msra.mxu0 0
        %306 = vmatprep.subr.bf16.mxu0 0
        %307 = vmatpush1.bf16.xpose.msra.mxu0 0
        %308 = vmatprep.subr.bf16.mxu0 0
        %309 = vmatpush1.bf16.xpose.msra.mxu0 0
        %310 = vmatprep.mubr.bf16.mxu0 0
        %311 = vmatmul.mubr.bf16.gmra.mrb[0].mxu0 %v252
        %v312 = vpop.f32.mrb[0].mxu0
        %v313 = vadd.f32 0.0, %v312
        %v314 = vpop.f32.mrb[0].mxu0
        %v315 = vpop.f32.mrb[0].mxu0
        %v316 = vpop.f32.mrb[0].mxu0
        %317 = vdwg.mxu0
        %318 = vst [vmem:[%s220] sm:$0xff] %v313
        %s319 = sand.u32 %s98, 1
        %s320 = scalar_lea.sflag [#allocation4], %s319
        %s321 = sand.u32 %s98, 1
        %s322 = smul.addr %s321, 8
        %s323 = scalar_lea.vmem [#allocation7], %s322
        // Predicated region
        $region37: #{tpu_custom_call.1} parent=27 // pred_check
          %p324 = pneg %p108
        $region38: #{tpu_custom_call.1} parent=27 // pred_check_branch
          %326 = sbr.rel (%p324) target = $region40
        $region39: #{tpu_custom_call.1} parent=27 // pred_region
          %s328 = ssub.s32 128, 128
          %329 = vsyncadd %s320, %s328
          %s330 = sadd.s32 %s27, %s26
          %s331 = smul.addr %s330, 128
          %s332 = scalar_lea.hbm %s2, %s331
          %s334 = sshll.u32 %s323, 4
          %s335 = int_to_ptr.vmem [resolvable:$true] %s334
          %337 = dma.vmem_to_hbm [thread:$0]  %s335, 128, %s332, %s320
        $region40: #{tpu_custom_call.1} parent=27 // pred_fallthru
          _
      $region28: #{tpu_custom_call.1} parent=5 // pred_fallthru
        _
      %p338 = scmp.le.s32.totalorder 2, %s17
      // Predicated region
      $region41: #{tpu_custom_call.1} parent=5 // pred_check
        %p339 = pneg %p338
      $region42: #{tpu_custom_call.1} parent=5 // pred_check_branch
        %341 = sbr.rel (%p339) target = $region44
      $region43: #{tpu_custom_call.1} parent=5 // pred_region
        %s342 = ssub.s32 %s17, 2
        // Predicated region
        $region45: #{tpu_custom_call.1} parent=43 // pred_check
          %p343 = pneg %p114
        $region46: #{tpu_custom_call.1} parent=43 // pred_check_branch
          %345 = sbr.rel (%p343) target = $region48
        $region47: #{tpu_custom_call.1} parent=43 // pred_region
          %s346 = sand.u32 %s99, 1
          %s347 = scalar_lea.sflag [#allocation4], %s346
          %s348 = sand.u32 %s99, 1
          %s349 = smul.addr %s348, 8
          %s350 = scalar_lea.vmem [#allocation7], %s349
          %351 = dma.done %s347, 128
        $region48: #{tpu_custom_call.1} parent=43 // pred_fallthru
          _
      $region44: #{tpu_custom_call.1} parent=5 // pred_fallthru
        _
    $region6: #{tpu_custom_call.1} parent=1 // loop_footer
      %s21 = sadd.s32 1, %s17
    $region7: #{tpu_custom_call.1} parent=1 // loop_footer_branch
      %16 = sbr.rel target = $region3
    $region8: #{tpu_custom_call.1} parent=1 // loop_exit
      _
    %352 = vsyncpa [#allocation3], 1
    %s353 = scalar_lea.sflag [#allocation3], 1
    %354 = vsyncpa %s353, 1
    %355 = vsyncpa [#allocation6], 1
    %s356 = scalar_lea.sflag [#allocation6], 1
    %357 = vsyncpa %s356, 1
    %358 = vsyncpa [#allocation4], 1
    %s359 = scalar_lea.sflag [#allocation4], 1
    %360 = vsyncpa %s359, 1

</llo_original>
